<compile_context>
chip_gen: v7x
topology: tpu7x:2x2x1
jax: 0.10.0
libtpu: 0.0.40
codegen_flags: <defaults>
</compile_context>

<pallas_src>
import jax
import jax.numpy as jnp
from jax.experimental import pallas as pl
from jax.experimental.pallas import tpu as pltpu


# ---------------------------------------------------------------------------
# Pallas kernel: fused Linear -> ReLU -> Linear over row tiles of ROIs.
# ---------------------------------------------------------------------------
def _roi_fc_kernel(x_ref, w1_ref, w2_ref, b_ref, o_ref):
    x = x_ref[...]                                             # (TM, K)
    h = jnp.dot(x, w1_ref[...], preferred_element_type=jnp.float32) + b_ref[0:1, :]
    h = jnp.maximum(h, 0.0)                                    # ReLU
    out = jnp.dot(h, w2_ref[...], preferred_element_type=jnp.float32) + b_ref[1:2, :]
    o_ref[...] = out.astype(o_ref.dtype)


def _round_up(n, m):
    return ((n + m - 1) // m) * m


def _pick_tile(rows, max_tile=1024):
    """Row-tile size (sublane-aligned).

    - Small ROI counts (<= 512 rows): a single block.  On 1-TC chips
      (v5e/v6e) a multi-step grid is pure per-step overhead, and even on v7x
      two tiny half-blocks under-fill the MXU and lose to one block.
    - Larger counts: split so each tile carries >= 256 rows (v7x gets both
      TensorCores busy via the "parallel" grid axis), capped at max_tile so
      per-step overhead (~0.35 us) stays amortized and VMEM stays tiny.
    """
    rounded = max(8, _round_up(rows, 8))
    if rounded <= 512:
        return min(rounded, max_tile)
    half = _round_up(-(-rows // 2), 8)          # cdiv(rows, 2), sublane-aligned
    return min(max_tile, max(half, 256))


def roi_fc_pallas(x, params, *, max_tile=1024):
    """x: (R, K) f32 -> (R, D) f32 via fused two-layer MLP."""
    rows, K = x.shape
    w1, b1, w2, b2 = params["w1"], params["b1"], params["w2"], params["b2"]
    D = w1.shape[1]
    b_packed = jnp.stack([b1, b2], axis=0)      # (2, D): one DMA instead of two

    tile = _pick_tile(rows, max_tile)
    grid = (pl.cdiv(rows, tile),)               # ragged last block handled by Pallas

    cost = pl.CostEstimate(
        flops=2 * rows * (K * D + D * D),
        transcendentals=0,
        bytes_accessed=4 * (rows * K + rows * D + K * D + D * D + 2 * D),
    )

    out = pl.pallas_call(
        _roi_fc_kernel,
        out_shape=jax.ShapeDtypeStruct((rows, D), jnp.float32),
        grid=grid,
        in_specs=[
            pl.BlockSpec((tile, K), lambda i: (i, 0)),   # ROI-row tile
            pl.BlockSpec((K, D), lambda i: (0, 0)),      # W1 (resident)
            pl.BlockSpec((D, D), lambda i: (0, 0)),      # W2 (resident)
            pl.BlockSpec((2, D), lambda i: (0, 0)),      # [b1; b2] packed
        ],
        out_specs=pl.BlockSpec((tile, D), lambda i: (i, 0)),
        compiler_params=pltpu.CompilerParams(
            dimension_semantics=("parallel",)),
        cost_estimate=cost,
    )(x, w1, w2, b_packed)
    return out


# ---------------------------------------------------------------------------
# Plain-JAX pieces of the module (box formatting + roi_align, torchvision
# semantics: aligned=False, sampling_ratio=2).
# ---------------------------------------------------------------------------
def convert_to_roi_format(lines_box):
    concat_boxes = jnp.concatenate(lines_box, axis=0)
    ids = jnp.concatenate(
        [jnp.full((b.shape[0], 1), i, dtype=concat_boxes.dtype)
         for i, b in enumerate(lines_box)], axis=0)
    return jnp.concatenate([ids, concat_boxes], axis=1)


def _axis_interp_weights(start, bin_sz, pooled, size, sr, dtype):
    """Per-ROI 1-D bilinear interpolation matrix: (N, pooled*sr, size)."""
    s = jnp.arange(pooled * sr)
    ph = (s // sr).astype(dtype)
    sub = (s % sr).astype(dtype)
    coord = (start[:, None]
             + ph[None, :] * bin_sz[:, None]
             + (sub[None, :] + 0.5) * bin_sz[:, None] / sr)       # (N, pooled*sr)
    valid = ((coord >= -1.0) & (coord <= size)).astype(dtype)
    c = jnp.maximum(coord, 0.0)
    low = jnp.minimum(jnp.floor(c).astype(jnp.int32), size - 1)
    high = jnp.minimum(low + 1, size - 1)
    frac = jnp.where(low >= size - 1, 0.0, c - low.astype(dtype))
    w_low = (1.0 - frac) * valid
    w_high = frac * valid
    oh_low = jax.nn.one_hot(low, size, dtype=dtype)
    oh_high = jax.nn.one_hot(high, size, dtype=dtype)
    return w_low[..., None] * oh_low + w_high[..., None] * oh_high


def roi_align_jax(feats, rois, output_size, spatial_scale, sampling_ratio=2):
    """feats: (B, C, H, W), rois: (N, 5) -> pooled (N, C, PH, PW)."""
    B, C, H, W = feats.shape
    PH, PW = output_size
    SR = int(sampling_ratio)
    dtype = feats.dtype
    N = rois.shape[0]

    batch_idx = rois[:, 0].astype(jnp.int32)
    x1 = rois[:, 1] * spatial_scale
    y1 = rois[:, 2] * spatial_scale
    x2 = rois[:, 3] * spatial_scale
    y2 = rois[:, 4] * spatial_scale
    roi_w = jnp.maximum(x2 - x1, 1.0)          # aligned=False behavior
    roi_h = jnp.maximum(y2 - y1, 1.0)
    bin_w = roi_w / PW
    bin_h = roi_h / PH

    Wy = _axis_interp_weights(y1, bin_h, PH, H, SR, dtype)   # (N, PH*SR, H)
    Wx = _axis_interp_weights(x1, bin_w, PW, W, SR, dtype)   # (N, PW*SR, W)

    # TODO(synk): fuse this gather+einsum into the Pallas FC kernel via
    # scalar-prefetched batch ids and manual DMA gathers; at realistic N this
    # replication of the feature map dominates HBM traffic.
    feats_per_roi = feats[batch_idx]                          # (N, C, H, W)
    sampled = jnp.einsum('nsh,nchw,ntw->ncst', Wy, feats_per_roi, Wx)
    pooled = sampled.reshape(N, C, PH, SR, PW, SR).mean(axis=(3, 5))
    return pooled


# ---------------------------------------------------------------------------
# Module forward + pure-JAX reference.
# ---------------------------------------------------------------------------
def roi_feat_extractor_forward(feats, lines_box, params, *, scale, pool_size):
    rois = convert_to_roi_format(lines_box)
    pooled = roi_align_jax(feats, rois, pool_size, scale, sampling_ratio=2)
    x = pooled.reshape(pooled.shape[0], -1).astype(jnp.float32)
    return roi_fc_pallas(x, params)


def roi_feat_extractor_reference(feats, lines_box, params, *, scale, pool_size):
    rois = convert_to_roi_format(lines_box)
    pooled = roi_align_jax(feats, rois, pool_size, scale, sampling_ratio=2)
    x = pooled.reshape(pooled.shape[0], -1).astype(jnp.float32)
    h = jnp.maximum(x @ params["w1"] + params["b1"], 0.0)
    return h @ params["w2"] + params["b2"]


def init_params(key, in_dim, out_dim):
    """Weights stored as (in_features, out_features) so the kernel does x @ W + b."""
    ks = jax.random.split(key, 4)
    return {
        "w1": jax.random.normal(ks[0], (in_dim, out_dim), jnp.float32) * 0.05,
        "b1": jax.random.normal(ks[1], (out_dim,), jnp.float32) * 0.05,
        "w2": jax.random.normal(ks[2], (out_dim, out_dim), jnp.float32) * 0.05,
        "b2": jax.random.normal(ks[3], (out_dim,), jnp.float32) * 0.05,
    }


if __name__ == "__main__":
    # Small shapes consistent with the module:
    B, C, H, W = 2, 4, 16, 16          # feature map (batch, channels, spatial)
    scale = 0.25                       # feature map is 1/4 of the 64x64 image
    pool_size = (4, 4)
    output_dim = 128
    in_dim_flat = C * pool_size[0] * pool_size[1]

    key = jax.random.PRNGKey(0)
    k_feat, k_box1, k_box2, k_params = jax.random.split(key, 4)

    feats = jax.random.normal(k_feat, (B, C, H, W), jnp.float32)

    def make_boxes(k, n, img_size=64.0):
        k1, k2 = jax.random.split(k)
        xy1 = jax.random.uniform(k1, (n, 2), jnp.float32, 0.0, img_size - 16.0)
        wh = jax.random.uniform(k2, (n, 2), jnp.float32, 2.0, 12.0)
        xy2 = jnp.minimum(xy1 + wh, img_size - 1.0)
        return jnp.concatenate([xy1, xy2], axis=1)

    lines_box = [make_boxes(k_box1, 40), make_boxes(k_box2, 24)]   # 64 ROIs total
    params = init_params(k_params, in_dim_flat, output_dim)

    out = roi_feat_extractor_forward(feats, lines_box, params,
                                     scale=scale, pool_size=pool_size)
    out = jax.block_until_ready(out)

    ref = roi_feat_extractor_reference(feats, lines_box, params,
                                       scale=scale, pool_size=pool_size)
    assert out.shape == (64, output_dim)
    assert jnp.allclose(out, ref, atol=1e-4, rtol=1e-4), "mismatch vs reference"

    print("KERNEL_OK")
</pallas_src>

<mosaic_0001>
module attributes {stable_mosaic.version = 11 : i64} {
  func.func @_roi_fc_kernel(%arg0: i32, %arg1: memref<64x64xf32, #tpu.memory_space<vmem>>, %arg2: memref<64x128xf32, #tpu.memory_space<vmem>>, %arg3: memref<128x128xf32, #tpu.memory_space<vmem>>, %arg4: memref<2x128xf32, #tpu.memory_space<vmem>>, %arg5: memref<64x128xf32, #tpu.memory_space<vmem>>) attributes {dimension_semantics = [#tpu.dimension_semantics<parallel>], iteration_bounds = array<i64: 1>, scalar_prefetch = 0 : i64, scratch_operands = 0 : i64, tpu.core_type = #tpu.core_type<tc>, window_params = [{transform_indices = @transform_0, window_bounds = array<i64: 64, 64>}, {pipeline_mode = #tpu.pipeline_mode<synchronous>, transform_indices = @transform_1, window_bounds = array<i64: 64, 128>}, {pipeline_mode = #tpu.pipeline_mode<synchronous>, transform_indices = @transform_2, window_bounds = array<i64: 128, 128>}, {pipeline_mode = #tpu.pipeline_mode<synchronous>, transform_indices = @transform_3, window_bounds = array<i64: 2, 128>}, {transform_indices = @transform_4, window_bounds = array<i64: 64, 128>}]} {
    %c0 = arith.constant 0 : index
    %c0_0 = arith.constant 0 : index
    %0 = vector.load %arg1[%c0, %c0_0] : memref<64x64xf32, #tpu.memory_space<vmem>>, vector<64x64xf32>
    %c0_1 = arith.constant 0 : index
    %c0_2 = arith.constant 0 : index
    %1 = vector.load %arg2[%c0_1, %c0_2] : memref<64x128xf32, #tpu.memory_space<vmem>>, vector<64x128xf32>
    %cst = arith.constant dense<0.000000e+00> : vector<64x128xf32>
    %2 = tpu.matmul %0, %1, %cst {dimension_numbers = #tpu.dot_dimension_numbers<[1], [0], [0], [1], [0, 0, 1, 1], [], []>} : vector<64x64xf32>, vector<64x128xf32>, vector<64x128xf32> -> vector<64x128xf32>
    %c0_3 = arith.constant 0 : index
    %c0_4 = arith.constant 0 : index
    %3 = vector.load %arg4[%c0_3, %c0_4] : memref<2x128xf32, #tpu.memory_space<vmem>>, vector<1x128xf32>
    %4 = vector.broadcast %3 : vector<1x128xf32> to vector<64x128xf32>
    %5 = arith.addf %2, %4 : vector<64x128xf32>
    %cst_5 = arith.constant 0.000000e+00 : f32
    %6 = vector.broadcast %cst_5 : f32 to vector<64x128xf32>
    %7 = arith.maximumf %5, %6 : vector<64x128xf32>
    %c0_6 = arith.constant 0 : index
    %c0_7 = arith.constant 0 : index
    %8 = vector.load %arg3[%c0_6, %c0_7] : memref<128x128xf32, #tpu.memory_space<vmem>>, vector<128x128xf32>
    %cst_8 = arith.constant dense<0.000000e+00> : vector<64x128xf32>
    %9 = tpu.matmul %7, %8, %cst_8 {dimension_numbers = #tpu.dot_dimension_numbers<[1], [0], [0], [1], [0, 0, 1, 1], [], []>} : vector<64x128xf32>, vector<128x128xf32>, vector<64x128xf32> -> vector<64x128xf32>
    %c1 = arith.constant 1 : index
    %c0_9 = arith.constant 0 : index
    %10 = vector.load %arg4[%c1, %c0_9] : memref<2x128xf32, #tpu.memory_space<vmem>>, vector<1x128xf32>
    %11 = vector.broadcast %10 : vector<1x128xf32> to vector<64x128xf32>
    %12 = arith.addf %9, %11 : vector<64x128xf32>
    %c0_10 = arith.constant 0 : index
    %c0_11 = arith.constant 0 : index
    %13 = vector.load %arg5[%c0_10, %c0_11] : memref<64x128xf32, #tpu.memory_space<vmem>>, vector<64x128xf32>
    tpu.vector_store %arg5[%c0_10, %c0_11], %12 {strides = array<i32>} : memref<64x128xf32, #tpu.memory_space<vmem>>, vector<64x128xf32>,
    return
  }
  func.func @transform_0(%arg0: i32) -> (i32, i32) {
    %c0_i32 = arith.constant 0 : i32
    %c0_i32_0 = arith.constant 0 : i32
    return %arg0, %c0_i32 : i32, i32
  }
  func.func @transform_1(%arg0: i32) -> (i32, i32) {
    %c0_i32 = arith.constant 0 : i32
    %c0_i32_0 = arith.constant 0 : i32
    %c0_i32_1 = arith.constant 0 : i32
    return %c0_i32, %c0_i32_0 : i32, i32
  }
  func.func @transform_2(%arg0: i32) -> (i32, i32) {
    %c0_i32 = arith.constant 0 : i32
    %c0_i32_0 = arith.constant 0 : i32
    %c0_i32_1 = arith.constant 0 : i32
    return %c0_i32, %c0_i32_0 : i32, i32
  }
  func.func @transform_3(%arg0: i32) -> (i32, i32) {
    %c0_i32 = arith.constant 0 : i32
    %c0_i32_0 = arith.constant 0 : i32
    %c0_i32_1 = arith.constant 0 : i32
    return %c0_i32, %c0_i32_0 : i32, i32
  }
  func.func @transform_4(%arg0: i32) -> (i32, i32) {
    %c0_i32 = arith.constant 0 : i32
    %c0_i32_0 = arith.constant 0 : i32
    return %arg0, %c0_i32 : i32, i32
  }
}

</mosaic_0001>

<llo_original>
// kernel: tpu_custom_call.1
$region0: #{tpu_custom_call.1}
  #allocation0 [shape = 'u32[]', space=smem, size = 0x4, offset = 0x4, fixed_abs, tag = 'smem constant byte address 0x4 - core index']
  #allocation1 [shape = 'u32[144,128]{1,0:T(1,128)}', space=vmem, size = 0x12000, scoped, tag = 'internal scratch']
  %s0 = inlined_call_operand.hbm [shape: f32[64,64], index: 0, kind: input, shape index: {}]
  %s1 = inlined_call_operand.hbm [shape: f32[64,128], index: 1, kind: input, shape index: {}]
  %s2 = inlined_call_operand.hbm [shape: f32[128,128], index: 2, kind: input, shape index: {}]
  %s3 = inlined_call_operand.vmem [shape: f32[2,128], index: 3, kind: input, shape index: {}]
  %s4 = inlined_call_operand.hbm [shape: f32[64,128], index: 4, kind: output, shape index: {}]
  %s5 = sld [smem:[#allocation0]]
  $region38: #{tpu_custom_call.1} parent=0
    _
  %s7 = ssub.s32 1, %s5
  %s8 = scalar_select 0, %s7, %s5
  $region1: #{tpu_custom_call.1} parent=0
    #allocation2 [shape = 'u8[32768]{0}', space=vmem, size = 0x8000, scoped, tag = 'input window, operand 0, single buffered']
    #allocation3 [shape = 's32[1]{0}', space=sflag, size = 0x4, scoped, tag = 'scoped memory for tpu_custom_call.1']
    #allocation4 [shape = 's32[1]{0}', space=sflag, size = 0x4, scoped, tag = 'scoped memory for tpu_custom_call.1']
    #allocation5 [shape = 'u8[32768]{0}', space=vmem, size = 0x8000, scoped, tag = 'input window, operand 1, single buffered']
    #allocation6 [shape = 's32[1]{0}', space=sflag, size = 0x4, scoped, tag = 'scoped memory for tpu_custom_call.1']
    #allocation7 [shape = 'u8[65536]{0}', space=vmem, size = 0x10000, scoped, tag = 'input window, operand 2, single buffered']
    #allocation8 [shape = 'u8[32768]{0}', space=vmem, size = 0x8000, scoped, tag = 'output window, operand 0, single buffered']
    %9 = vsyncpa [#allocation3], 0
    %10 = vsyncpa [#allocation6], 0
    %11 = vsyncpa [#allocation4], 0
    // Predicated region
    $region2: #{tpu_custom_call.1} parent=1 // pred_check
      _
    $region3: #{tpu_custom_call.1} parent=1 // pred_check_branch
      %13 = sbr.rel (0) target = $region5
    $region4: #{tpu_custom_call.1} parent=1 // pred_region
      %s15 = ssub.s32 1024, 1024
      %16 = vsyncadd [#allocation3], %s15
      %s17 = sshll.u32 [#allocation2], 4
      %s18 = int_to_ptr.vmem [resolvable:$true] %s17
      %23 = dma.hbm_to_vmem [thread:$0]  %s0, 1024, %s18, [#allocation3], 128, 128, 8
    $region5: #{tpu_custom_call.1} parent=1 // pred_fallthru
      _
    // Predicated region
    $region6: #{tpu_custom_call.1} parent=1 // pred_check
      _
    $region7: #{tpu_custom_call.1} parent=1 // pred_check_branch
      %25 = sbr.rel (0) target = $region9
    $region8: #{tpu_custom_call.1} parent=1 // pred_region
      %s27 = ssub.s32 1024, 1024
      %28 = vsyncadd [#allocation6], %s27
      %s29 = sshll.u32 [#allocation5], 4
      %s30 = int_to_ptr.vmem [resolvable:$true] %s29
      %35 = dma.hbm_to_vmem [thread:$0]  %s1, 1024, %s30, [#allocation6], 128, 128, 8
    $region9: #{tpu_custom_call.1} parent=1 // pred_fallthru
      _
    // Predicated region
    $region10: #{tpu_custom_call.1} parent=1 // pred_check
      _
    $region11: #{tpu_custom_call.1} parent=1 // pred_check_branch
      %37 = sbr.rel (0) target = $region13
    $region12: #{tpu_custom_call.1} parent=1 // pred_region
      %s39 = ssub.s32 2048, 2048
      %40 = vsyncadd [#allocation6], %s39
      %s41 = sshll.u32 [#allocation7], 4
      %s42 = int_to_ptr.vmem [resolvable:$true] %s41
      %47 = dma.hbm_to_vmem [thread:$0]  %s2, 2048, %s42, [#allocation6], 128, 128, 8
    $region13: #{tpu_custom_call.1} parent=1 // pred_fallthru
      _
    // Predicated region
    $region14: #{tpu_custom_call.1} parent=1 // pred_check
      _
    $region15: #{tpu_custom_call.1} parent=1 // pred_check_branch
      %49 = sbr.rel (0) target = $region17
    $region16: #{tpu_custom_call.1} parent=1 // pred_region
      _
    $region17: #{tpu_custom_call.1} parent=1 // pred_fallthru
      _
    // Predicated region
    $region18: #{tpu_custom_call.1} parent=1 // pred_check
      _
    $region19: #{tpu_custom_call.1} parent=1 // pred_check_branch
      %51 = sbr.rel (0) target = $region21
    $region20: #{tpu_custom_call.1} parent=1 // pred_region
      %52 = dma.done [#allocation3], 1024
    $region21: #{tpu_custom_call.1} parent=1 // pred_fallthru
      _
    // Predicated region
    $region22: #{tpu_custom_call.1} parent=1 // pred_check
      _
    $region23: #{tpu_custom_call.1} parent=1 // pred_check_branch
      %54 = sbr.rel (0) target = $region25
    $region24: #{tpu_custom_call.1} parent=1 // pred_region
      %55 = dma.done [#allocation6], 1024
    $region25: #{tpu_custom_call.1} parent=1 // pred_fallthru
      _
    // Predicated region
    $region26: #{tpu_custom_call.1} parent=1 // pred_check
      _
    $region27: #{tpu_custom_call.1} parent=1 // pred_check_branch
      %57 = sbr.rel (0) target = $region29
    $region28: #{tpu_custom_call.1} parent=1 // pred_region
      %58 = dma.done [#allocation6], 2048
    $region29: #{tpu_custom_call.1} parent=1 // pred_fallthru
      _
    %v59 = vld [vmem:[#allocation2] sm:$0xff]
    %v60 = vld [vmem:[#allocation2 + $0x8] sm:$0xff]
    %v61 = vld [vmem:[#allocation2 + $0x10] sm:$0xff]
    %v62 = vld [vmem:[#allocation2 + $0x18] sm:$0xff]
    %v63 = vld [vmem:[#allocation2 + $0x20] sm:$0xff]
    %v64 = vld [vmem:[#allocation2 + $0x28] sm:$0xff]
    %v65 = vld [vmem:[#allocation2 + $0x30] sm:$0xff]
    %v66 = vld [vmem:[#allocation2 + $0x38] sm:$0xff]
    %v67 = vld [vmem:[#allocation5] sm:$0xff]
    %v68 = vld [vmem:[#allocation5 + $0x8] sm:$0xff]
    %v69 = vld [vmem:[#allocation5 + $0x10] sm:$0xff]
    %v70 = vld [vmem:[#allocation5 + $0x18] sm:$0xff]
    %v71 = vld [vmem:[#allocation5 + $0x20] sm:$0xff]
    %v72 = vld [vmem:[#allocation5 + $0x28] sm:$0xff]
    %v73 = vld [vmem:[#allocation5 + $0x30] sm:$0xff]
    %v74 = vld [vmem:[#allocation5 + $0x38] sm:$0xff]
    %v75 = vld [vmem:[%s3] sm:$0x1]
    %v76 = vlaneseq
    %v77 = vshrl.u32 %v76, 7
    %v78 = vsub.s32 0, %v77
    %v79 = vrot.slane %v75, %v78
    %vm80 = vcmask 523264
    %v82 = vsel %vm80, %v59, 0
    %v85 = vsel %vm80, %v60, 0
    %v88 = vsel %vm80, %v61, 0
    %v91 = vsel %vm80, %v62, 0
    %v94 = vsel %vm80, %v63, 0
    %v97 = vsel %vm80, %v64, 0
    %v100 = vsel %vm80, %v65, 0
    %v103 = vsel %vm80, %v66, 0
    %105 = vmatprep.subr.mxu0 0.0
    %106 = vmatpush1.msra.mxu0 %v67
    %107 = vmatprep.subr.mxu0 0.0
    %108 = vmatpush1.msra.mxu0 %v68
    %109 = vmatprep.subr.mxu0 0.0
    %110 = vmatpush1.msra.mxu0 %v69
    %111 = vmatprep.subr.mxu0 0.0
    %112 = vmatpush1.msra.mxu0 %v70
    %113 = vmatprep.subr.mxu0 0.0
    %114 = vmatpush1.msra.mxu0 %v71
    %115 = vmatprep.subr.mxu0 0.0
    %116 = vmatpush1.msra.mxu0 %v72
    %117 = vmatprep.subr.mxu0 0.0
    %118 = vmatpush1.msra.mxu0 %v73
    %119 = vmatprep.subr.mxu0 0.0
    %120 = vmatpush1.msra.mxu0 %v74
    %121 = vmatprep.subr.mxu0 0.0
    %122 = vmatpush1.msra.mxu0 0.0
    %123 = vmatprep.subr.mxu0 0.0
    %124 = vmatpush1.msra.mxu0 0.0
    %125 = vmatprep.subr.mxu0 0.0
    %126 = vmatpush1.msra.mxu0 0.0
    %127 = vmatprep.subr.mxu0 0.0
    %128 = vmatpush1.msra.mxu0 0.0
    %129 = vmatprep.subr.mxu0 0.0
    %130 = vmatpush1.msra.mxu0 0.0
    %131 = vmatprep.subr.mxu0 0.0
    %132 = vmatpush1.msra.mxu0 0.0
    %133 = vmatprep.subr.mxu0 0.0
    %134 = vmatpush1.msra.mxu0 0.0
    %135 = vmatprep.subr.mxu0 0.0
    %136 = vmatpush1.msra.mxu0 0.0
    %137 = vmatprep.subr.mxu0 0.0
    %138 = vmatpush1.msra.mxu0 0.0
    %139 = vmatprep.subr.mxu0 0.0
    %140 = vmatpush1.msra.mxu0 0.0
    %141 = vmatprep.subr.mxu0 0.0
    %142 = vmatpush1.msra.mxu0 0.0
    %143 = vmatprep.subr.mxu0 0.0
    %144 = vmatpush1.msra.mxu0 0.0
    %145 = vmatprep.subr.mxu0 0.0
    %146 = vmatpush1.msra.mxu0 0.0
    %147 = vmatprep.subr.mxu0 0.0
    %148 = vmatpush1.msra.mxu0 0.0
    %149 = vmatprep.subr.mxu0 0.0
    %150 = vmatpush1.msra.mxu0 0.0
    %151 = vmatprep.subr.mxu0 0.0
    %152 = vmatpush1.msra.mxu0 0.0
    %153 = vmatprep.subr.mxu0 0.0
    %154 = vmatpush1.msra.mxu0 0.0
    %155 = vmatprep.subr.mxu0 0.0
    %156 = vmatpush1.msra.mxu0 0.0
    %157 = vmatprep.subr.mxu0 0.0
    %158 = vmatpush1.msra.mxu0 0.0
    %159 = vmatprep.subr.mxu0 0.0
    %160 = vmatpush1.msra.mxu0 0.0
    %161 = vmatprep.subr.mxu0 0.0
    %162 = vmatpush1.msra.mxu0 0.0
    %163 = vmatprep.subr.mxu0 0.0
    %164 = vmatpush1.msra.mxu0 0.0
    %165 = vmatprep.subr.mxu0 0.0
    %166 = vmatpush1.msra.mxu0 0.0
    %167 = vmatprep.subr.mxu0 0.0
    %168 = vmatpush1.msra.mxu0 0.0
    %169 = vmatprep.mubr.f32.mxu0 0.0
    %170 = vmatmul.mubr.f32.gmra.mrb[0].mxu0 %v82
    %v171 = vpop.f32.mrb[0].mxu0
    %v172 = vadd.f32 %v79, %v171
    %v173 = vpop.f32.mrb[0].mxu0
    %174 = vmatprep.mubr.f32.mxu0 0.0
    %175 = vmatmul.mubr.f32.gmra.mrb[0].mxu0 %v85
    %v176 = vpop.f32.mrb[0].mxu0
    %v177 = vadd.f32 %v79, %v176
    %v178 = vpop.f32.mrb[0].mxu0
    %179 = vmatprep.mubr.f32.mxu0 0.0
    %180 = vmatmul.mubr.f32.gmra.mrb[0].mxu0 %v88
    %v181 = vpop.f32.mrb[0].mxu0
    %v182 = vadd.f32 %v79, %v181
    %v183 = vpop.f32.mrb[0].mxu0
    %184 = vmatprep.mubr.f32.mxu0 0.0
    %185 = vmatmul.mubr.f32.gmra.mrb[0].mxu0 %v91
    %v186 = vpop.f32.mrb[0].mxu0
    %v187 = vadd.f32 %v79, %v186
    %v188 = vpop.f32.mrb[0].mxu0
    %189 = vmatprep.mubr.f32.mxu0 0.0
    %190 = vmatmul.mubr.f32.gmra.mrb[0].mxu0 %v94
    %v191 = vpop.f32.mrb[0].mxu0
    %v192 = vadd.f32 %v79, %v191
    %v193 = vpop.f32.mrb[0].mxu0
    %194 = vmatprep.mubr.f32.mxu0 0.0
    %195 = vmatmul.mubr.f32.gmra.mrb[0].mxu0 %v97
    %v196 = vpop.f32.mrb[0].mxu0
    %v197 = vadd.f32 %v79, %v196
    %v198 = vpop.f32.mrb[0].mxu0
    %199 = vmatprep.mubr.f32.mxu0 0.0
    %200 = vmatmul.mubr.f32.gmra.mrb[0].mxu0 %v100
    %v201 = vpop.f32.mrb[0].mxu0
    %v202 = vadd.f32 %v79, %v201
    %v203 = vpop.f32.mrb[0].mxu0
    %204 = vmatprep.mubr.f32.mxu0 0.0
    %205 = vmatmul.mubr.f32.gmra.mrb[0].mxu0 %v103
    %v206 = vpop.f32.mrb[0].mxu0
    %v207 = vadd.f32 %v79, %v206
    %v208 = vpop.f32.mrb[0].mxu0
    %209 = vdwg.mxu0
    %v210 = vmax.f32 %v172, 0.0
    %v211 = vmax.f32 %v177, 0.0
    %v212 = vmax.f32 %v182, 0.0
    %v213 = vmax.f32 %v187, 0.0
    %v214 = vmax.f32 %v192, 0.0
    %v215 = vmax.f32 %v197, 0.0
    %v216 = vmax.f32 %v202, 0.0
    %v217 = vmax.f32 %v207, 0.0
    %v218 = vld [vmem:[#allocation7] sm:$0xff]
    %v219 = vld [vmem:[#allocation7 + $0x8] sm:$0xff]
    %v220 = vld [vmem:[#allocation7 + $0x10] sm:$0xff]
    %v221 = vld [vmem:[#allocation7 + $0x18] sm:$0xff]
    %v222 = vld [vmem:[#allocation7 + $0x20] sm:$0xff]
    %v223 = vld [vmem:[#allocation7 + $0x28] sm:$0xff]
    %v224 = vld [vmem:[#allocation7 + $0x30] sm:$0xff]
    %v225 = vld [vmem:[#allocation7 + $0x38] sm:$0xff]
    %v226 = vld [vmem:[#allocation7 + $0x40] sm:$0xff]
    %v227 = vld [vmem:[#allocation7 + $0x48] sm:$0xff]
    %v228 = vld [vmem:[#allocation7 + $0x50] sm:$0xff]
    %v229 = vld [vmem:[#allocation7 + $0x58] sm:$0xff]
    %v230 = vld [vmem:[#allocation7 + $0x60] sm:$0xff]
    %v231 = vld [vmem:[#allocation7 + $0x68] sm:$0xff]
    %v232 = vld [vmem:[#allocation7 + $0x70] sm:$0xff]
    %v233 = vld [vmem:[#allocation7 + $0x78] sm:$0xff]
    %v234 = vld [vmem:[%s3 + $0x1] sm:$0x1]
    %v235 = vlaneseq
    %v236 = vshrl.u32 %v235, 7
    %v237 = vsub.s32 0, %v236
    %v238 = vrot.slane %v234, %v237
    %239 = vmatprep.subr.mxu0 0.0
    %240 = vmatpush1.msra.mxu0 %v218
    %241 = vmatprep.subr.mxu0 0.0
    %242 = vmatpush1.msra.mxu0 %v219
    %243 = vmatprep.subr.mxu0 0.0
    %244 = vmatpush1.msra.mxu0 %v220
    %245 = vmatprep.subr.mxu0 0.0
    %246 = vmatpush1.msra.mxu0 %v221
    %247 = vmatprep.subr.mxu0 0.0
    %248 = vmatpush1.msra.mxu0 %v222
    %249 = vmatprep.subr.mxu0 0.0
    %250 = vmatpush1.msra.mxu0 %v223
    %251 = vmatprep.subr.mxu0 0.0
    %252 = vmatpush1.msra.mxu0 %v224
    %253 = vmatprep.subr.mxu0 0.0
    %254 = vmatpush1.msra.mxu0 %v225
    %255 = vmatprep.subr.mxu0 0.0
    %256 = vmatpush1.msra.mxu0 %v226
    %257 = vmatprep.subr.mxu0 0.0
    %258 = vmatpush1.msra.mxu0 %v227
    %259 = vmatprep.subr.mxu0 0.0
    %260 = vmatpush1.msra.mxu0 %v228
    %261 = vmatprep.subr.mxu0 0.0
    %262 = vmatpush1.msra.mxu0 %v229
    %263 = vmatprep.subr.mxu0 0.0
    %264 = vmatpush1.msra.mxu0 %v230
    %265 = vmatprep.subr.mxu0 0.0
    %266 = vmatpush1.msra.mxu0 %v231
    %267 = vmatprep.subr.mxu0 0.0
    %268 = vmatpush1.msra.mxu0 %v232
    %269 = vmatprep.subr.mxu0 0.0
    %270 = vmatpush1.msra.mxu0 %v233
    %271 = vmatprep.subr.mxu0 0.0
    %272 = vmatpush1.msra.mxu0 0.0
    %273 = vmatprep.subr.mxu0 0.0
    %274 = vmatpush1.msra.mxu0 0.0
    %275 = vmatprep.subr.mxu0 0.0
    %276 = vmatpush1.msra.mxu0 0.0
    %277 = vmatprep.subr.mxu0 0.0
    %278 = vmatpush1.msra.mxu0 0.0
    %279 = vmatprep.subr.mxu0 0.0
    %280 = vmatpush1.msra.mxu0 0.0
    %281 = vmatprep.subr.mxu0 0.0
    %282 = vmatpush1.msra.mxu0 0.0
    %283 = vmatprep.subr.mxu0 0.0
    %284 = vmatpush1.msra.mxu0 0.0
    %285 = vmatprep.subr.mxu0 0.0
    %286 = vmatpush1.msra.mxu0 0.0
    %287 = vmatprep.subr.mxu0 0.0
    %288 = vmatpush1.msra.mxu0 0.0
    %289 = vmatprep.subr.mxu0 0.0
    %290 = vmatpush1.msra.mxu0 0.0
    %291 = vmatprep.subr.mxu0 0.0
    %292 = vmatpush1.msra.mxu0 0.0
    %293 = vmatprep.subr.mxu0 0.0
    %294 = vmatpush1.msra.mxu0 0.0
    %295 = vmatprep.subr.mxu0 0.0
    %296 = vmatpush1.msra.mxu0 0.0
    %297 = vmatprep.subr.mxu0 0.0
    %298 = vmatpush1.msra.mxu0 0.0
    %299 = vmatprep.subr.mxu0 0.0
    %300 = vmatpush1.msra.mxu0 0.0
    %301 = vmatprep.subr.mxu0 0.0
    %302 = vmatpush1.msra.mxu0 0.0
    %303 = vmatprep.mubr.f32.mxu0 0.0
    %304 = vmatmul.mubr.f32.gmra.mrb[0].mxu0 %v210
    %v305 = vpop.f32.mrb[0].mxu0
    %v306 = vadd.f32 %v238, %v305
    %v307 = vpop.f32.mrb[0].mxu0
    %308 = vmatprep.mubr.f32.mxu0 0.0
    %309 = vmatmul.mubr.f32.gmra.mrb[0].mxu0 %v211
    %v310 = vpop.f32.mrb[0].mxu0
    %v311 = vadd.f32 %v238, %v310
    %v312 = vpop.f32.mrb[0].mxu0
    %313 = vmatprep.mubr.f32.mxu0 0.0
    %314 = vmatmul.mubr.f32.gmra.mrb[0].mxu0 %v212
    %v315 = vpop.f32.mrb[0].mxu0
    %v316 = vadd.f32 %v238, %v315
    %v317 = vpop.f32.mrb[0].mxu0
    %318 = vmatprep.mubr.f32.mxu0 0.0
    %319 = vmatmul.mubr.f32.gmra.mrb[0].mxu0 %v213
    %v320 = vpop.f32.mrb[0].mxu0
    %v321 = vadd.f32 %v238, %v320
    %v322 = vpop.f32.mrb[0].mxu0
    %323 = vmatprep.mubr.f32.mxu0 0.0
    %324 = vmatmul.mubr.f32.gmra.mrb[0].mxu0 %v214
    %v325 = vpop.f32.mrb[0].mxu0
    %v326 = vadd.f32 %v238, %v325
    %v327 = vpop.f32.mrb[0].mxu0
    %328 = vmatprep.mubr.f32.mxu0 0.0
    %329 = vmatmul.mubr.f32.gmra.mrb[0].mxu0 %v215
    %v330 = vpop.f32.mrb[0].mxu0
    %v331 = vadd.f32 %v238, %v330
    %v332 = vpop.f32.mrb[0].mxu0
    %333 = vmatprep.mubr.f32.mxu0 0.0
    %334 = vmatmul.mubr.f32.gmra.mrb[0].mxu0 %v216
    %v335 = vpop.f32.mrb[0].mxu0
    %v336 = vadd.f32 %v238, %v335
    %v337 = vpop.f32.mrb[0].mxu0
    %338 = vmatprep.mubr.f32.mxu0 0.0
    %339 = vmatmul.mubr.f32.gmra.mrb[0].mxu0 %v217
    %v340 = vpop.f32.mrb[0].mxu0
    %v341 = vadd.f32 %v238, %v340
    %v342 = vpop.f32.mrb[0].mxu0
    %343 = vdwg.mxu0
    %344 = vst [vmem:[#allocation8] sm:$0xff] %v306
    %345 = vst [vmem:[#allocation8 + $0x8] sm:$0xff] %v311
    %346 = vst [vmem:[#allocation8 + $0x10] sm:$0xff] %v316
    %347 = vst [vmem:[#allocation8 + $0x18] sm:$0xff] %v321
    %348 = vst [vmem:[#allocation8 + $0x20] sm:$0xff] %v326
    %349 = vst [vmem:[#allocation8 + $0x28] sm:$0xff] %v331
    %350 = vst [vmem:[#allocation8 + $0x30] sm:$0xff] %v336
    %351 = vst [vmem:[#allocation8 + $0x38] sm:$0xff] %v341
    // Predicated region
    $region30: #{tpu_custom_call.1} parent=1 // pred_check
      _
    $region31: #{tpu_custom_call.1} parent=1 // pred_check_branch
      %353 = sbr.rel (0) target = $region33
    $region32: #{tpu_custom_call.1} parent=1 // pred_region
      %s355 = ssub.s32 1024, 1024
      %356 = vsyncadd [#allocation4], %s355
      %s357 = sshll.u32 [#allocation8], 4
      %s358 = int_to_ptr.vmem [resolvable:$true] %s357
      %363 = dma.vmem_to_hbm [thread:$0]  %s358, 1024, %s4, [#allocation4], 128, 128, 8
    $region33: #{tpu_custom_call.1} parent=1 // pred_fallthru
      _
    // Predicated region
    $region34: #{tpu_custom_call.1} parent=1 // pred_check
      _
    $region35: #{tpu_custom_call.1} parent=1 // pred_check_branch
      %365 = sbr.rel (0) target = $region37
    $region36: #{tpu_custom_call.1} parent=1 // pred_region
      %366 = dma.done [#allocation4], 1024
    $region37: #{tpu_custom_call.1} parent=1 // pred_fallthru
      _
    %367 = vsyncpa [#allocation3], 1
    %368 = vsyncpa [#allocation6], 1
    %369 = vsyncpa [#allocation4], 1

</llo_original>
